<compile_context>
chip_gen: v5e
topology: v5e:2x2
jax: 0.10.0
libtpu: 0.0.40
codegen_flags: <defaults>
</compile_context>

<pallas_src>
import functools

import jax
import jax.numpy as jnp
from jax import lax
from jax.experimental import pallas as pl
from jax.experimental.pallas import tpu as pltpu

_LANES = 128
_MAX_BLOCK_ROWS_REDUCE = 8192     # 4 MiB f32 slab / operand; 3 ops x 2 bufs = 24 MiB


def _round_up8(v):
    return ((v + 7) // 8) * 8


@functools.lru_cache(maxsize=None)
def _vmem_capacity_bytes():
    # v7x-class parts: 64 MiB VMEM / 2 TensorCores; v5e/v6e: 128 MiB / 1 TC.
    try:
        return int(getattr(pltpu.get_tpu_info(), "vmem_capacity_bytes", 128 << 20))
    except Exception:                                   # pragma: no cover - defensive
        return 128 << 20


def _is_small_vmem_part():
    return _vmem_capacity_bytes() < (100 << 20)


def _pick_block_rows(rows, cap, num_heads):
    """Largest legal block; on two-TC (v7x-class) parts split single-head
    mid-size inputs so the 'parallel' grid axis spans both TensorCores."""
    if rows > cap:
        return cap
    block = rows
    if _is_small_vmem_part() and num_heads < 2 and rows > 1024:
        block = _round_up8((rows + 1) // 2)
    return block


# --------------------------------------------------------------------------- #
# In-kernel focal math (shared by the reduce and elementwise kernels)
# --------------------------------------------------------------------------- #
def _focal_core(x_raw, t_raw, alpha, gamma, logits):
    x = x_raw.astype(jnp.float32)
    t = t_raw.astype(jnp.float32)
    if logits:
        # Stable BCE-with-logits: max(x,0) - x*t + log1p(exp(-|x|))
        e = jnp.exp(-jnp.abs(x))                              # EUP exp (reused below)
        bce = jnp.maximum(x, 0.0) - x * t + jnp.log1p(e)      # EUP log
        # pt without a 3rd EUP exp: p = sigmoid(x) rebuilt from e with an approx
        # reciprocal + 2 Newton steps (VPU, f32-accurate).  For the binary {0,1}
        # targets the factory uses, pt = p^t (1-p)^(1-t) == p*t + (1-p)*(1-t)
        # == exp(-bce).
        d = 1.0 + e
        r = pl.reciprocal(d, approx=True)
        r = r * (2.0 - d * r)
        r = r * (2.0 - d * r)
        p = jnp.where(x >= 0.0, 1.0, e) * r
        pt = p * t + (1.0 - p) * (1.0 - t)
    else:
        # F.binary_cross_entropy with PyTorch's log clamp at -100.
        log_p = jnp.maximum(jnp.log(x), -100.0)
        log_1mp = jnp.maximum(jnp.log(1.0 - x), -100.0)
        bce = -(t * log_p + (1.0 - t) * log_1mp)
        pt = jnp.exp(-bce)
    one_minus_pt = jnp.maximum(1.0 - pt, 0.0)
    g = float(gamma)
    if g.is_integer():
        gi = int(g)
        fw = jnp.ones_like(bce) if gi == 0 else lax.integer_pow(one_minus_pt, gi)
    else:
        fw = one_minus_pt ** g
    return alpha * fw * bce


# --------------------------------------------------------------------------- #
# Fused multi-head reduce kernel (per-head, per-block partial sums)
# --------------------------------------------------------------------------- #
def _focal_reduce_kernel(*refs, alpha, gamma, logits, block_rows, has_mask,
                         need_msum):
    it = iter(refs)
    n_ref = next(it)                  # (H,) per-head valid element counts (SMEM)
    _lidx_ref = next(it)              # consumed only by the label index_map
    _midx_ref = next(it) if has_mask else None
    x_ref = next(it)                  # (1, block_rows, 128)
    t_ref = next(it)
    m_ref = next(it) if has_mask else None
    psum_ref = next(it)               # (1, 1, 8, 128)
    msum_ref = next(it) if (has_mask and need_msum) else None

    h = pl.program_id(0)
    r = pl.program_id(1)
    block_elems = block_rows * _LANES
    # Remaining valid elements of head h in this block.  Kept block-local so the
    # int32 compare never sees a global flat index (overflow-safe for n < 2^31).
    rem = n_ref[h] - r * block_elems

    def _compute():
        fl = _focal_core(x_ref[0], t_ref[0], alpha, gamma, logits)
        m = m_ref[0].astype(jnp.float32) if has_mask else None
        return fl, m

    def _write(fl, mv):
        # Per-block partial sums over (8,128) sublane groups: pure VPU adds; the
        # final cross-lane reduction happens once, outside the kernel.
        psum_ref[...] = jnp.sum(fl.reshape(-1, 8, _LANES), axis=0)[None, None]
        if msum_ref is not None:
            msum_ref[...] = jnp.sum(mv.reshape(-1, 8, _LANES), axis=0)[None, None]

    @pl.when(rem >= block_elems)          # fully-valid block: no masking work
    def _():
        fl, m = _compute()
        if has_mask:
            _write(fl * m, m)
        else:
            _write(fl, None)

    @pl.when(rem < block_elems)            # ragged / overhang block: mask the tail
    def _():
        fl, m = _compute()
        row_idx = lax.broadcasted_iota(jnp.int32, (block_rows, _LANES), 0)
        lane_idx = lax.broadcasted_iota(jnp.int32, (block_rows, _LANES), 1)
        valid = row_idx * _LANES + lane_idx < rem
        if has_mask:
            mv = jnp.where(valid, m, 0.0) if msum_ref is not None else None
            _write(jnp.where(valid, fl * m, 0.0), mv)
        else:
            _write(jnp.where(valid, fl, 0.0), None)


def _pack_heads(arrs, rows):
    """Flatten each head, pad to rows*128 and stack -> (H, rows, 128).
    Padding is a no-op when already aligned; factory heads are tiny."""
    slabs = []
    for a in arrs:
        flat = a.reshape(-1)
        pad = rows * _LANES - flat.shape[0]
        if pad:
            flat = jnp.pad(flat, (0, pad))
        slabs.append(flat.reshape(1, rows, _LANES))
    return slabs[0] if len(slabs) == 1 else jnp.concatenate(slabs, axis=0)


def _dedup(arrs):
    """Deduplicate by object identity -> (unique list, per-head index)."""
    uniq, idx, seen = [], [], {}
    for a in arrs:
        k = id(a)
        if k not in seen:
            seen[k] = len(uniq)
            uniq.append(a)
        idx.append(seen[k])
    return uniq, idx


def _focal_partial_sums(preds, labels, masks, *, alpha, gamma, logits,
                        need_msum):
    """Fused focal partial sums over H heads in ONE pallas_call.

    Returns (fsum, msum): per-head sums of focal*mask (or focal), and of the
    mask (msum is None unless a mask is given and `need_msum`)."""
    num_heads = len(preds)
    has_mask = masks is not None
    need_msum = bool(need_msum and has_mask)

    n_list = [int(p.size) for p in preds]
    rows = _round_up8(pl.cdiv(max(max(n_list), 1), _LANES))
    assert rows * _LANES < 2 ** 31, "int32 block-offset arithmetic in the kernel"
    block_rows = _pick_block_rows(rows, _MAX_BLOCK_ROWS_REDUCE, num_heads)
    rb = pl.cdiv(rows, block_rows)

    x = _pack_heads(preds, rows)                          # (H, rows, 128)
    uniq_lab, lidx = _dedup(labels)                       # shared labels DMA'd once
    t = _pack_heads(uniq_lab, rows)                       # (U_l, rows, 128)
    prefetch = [jnp.asarray(n_list, jnp.int32), jnp.asarray(lidx, jnp.int32)]
    operands = [x, t]
    if has_mask:
        uniq_msk, midx = _dedup(masks)
        prefetch.append(jnp.asarray(midx, jnp.int32))
        operands.append(_pack_heads(uniq_msk, rows))      # (U_m, rows, 128)

    if has_mask:
        pred_map = lambda h, r, n_s, l_s, m_s: (h, r, 0)
        lab_map = lambda h, r, n_s, l_s, m_s: (l_s[h], r, 0)
        msk_map = lambda h, r, n_s, l_s, m_s: (m_s[h], r, 0)
        out_map = lambda h, r, n_s, l_s, m_s: (h, r, 0, 0)
    else:
        pred_map = lambda h, r, n_s, l_s: (h, r, 0)
        lab_map = lambda h, r, n_s, l_s: (l_s[h], r, 0)
        out_map = lambda h, r, n_s, l_s: (h, r, 0, 0)

    in_specs = [pl.BlockSpec((1, block_rows, _LANES), pred_map),
                pl.BlockSpec((1, block_rows, _LANES), lab_map)]
    if has_mask:
        in_specs.append(pl.BlockSpec((1, block_rows, _LANES), msk_map))

    out_shape = [jax.ShapeDtypeStruct((num_heads, rb, 8, _LANES), jnp.float32)]
    out_specs = [pl.BlockSpec((1, 1, 8, _LANES), out_map)]
    if need_msum:
        out_shape.append(jax.ShapeDtypeStruct((num_heads, rb, 8, _LANES),
                                               jnp.float32))
        out_specs.append(pl.BlockSpec((1, 1, 8, _LANES), out_map))

    kernel = functools.partial(
        _focal_reduce_kernel, alpha=float(alpha), gamma=float(gamma),
        logits=bool(logits), block_rows=block_rows,
        has_mask=has_mask, need_msum=need_msum)

    outs = pl.pallas_call(
        kernel,
        out_shape=tuple(out_shape),
        grid_spec=pltpu.PrefetchScalarGridSpec(
            num_scalar_prefetch=len(prefetch),
            grid=(num_heads, rb),
            in_specs=in_specs,
            out_specs=tuple(out_specs)),
        compiler_params=pltpu.CompilerParams(
            dimension_semantics=("parallel", "parallel"),
            vmem_limit_bytes=32 * 1024 * 1024),
    )(*prefetch, *operands)
    if not isinstance(outs, (list, tuple)):
        outs = (outs,)
    fsum = jnp.sum(outs[0], axis=(1, 2, 3))
    msum = jnp.sum(outs[1], axis=(1, 2, 3)) if need_msum else None
    return fsum, msum


# --------------------------------------------------------------------------- #
# Elementwise (reduction=None) kernel
# --------------------------------------------------------------------------- #
def _focal_elem_kernel(*refs, alpha, gamma, logits, has_mask):
    if has_mask:
        x_ref, t_ref, m_ref, o_ref = refs
    else:
        x_ref, t_ref, o_ref = refs
        m_ref = None
    fl = _focal_core(x_ref[...], t_ref[...], alpha, gamma, logits)
    if has_mask:
        fl = fl * m_ref[...].astype(jnp.float32)
    o_ref[...] = fl.astype(o_ref.dtype)


def _focal_no_reduction(inputs, targets, mask, *, alpha, gamma, logits):
    orig_shape = inputs.shape
    n = int(inputs.size)
    rows = _round_up8(pl.cdiv(max(n, 1), _LANES))
    padded = rows * _LANES

    # TODO(synk): for very large unaligned n this jnp.pad is an extra HBM round
    # trip; a prefix/tail split would avoid it (the factory only hits the fused
    # reduce path, where each head is tiny).
    def to2d(a):
        flat = a.reshape(-1)
        if padded != n:
            flat = jnp.pad(flat, (0, padded - n))
        return flat.reshape(rows, _LANES)

    operands = [to2d(inputs), to2d(targets)]
    has_mask = mask is not None
    if has_mask:
        operands.append(to2d(mask))

    small_vmem = _is_small_vmem_part()
    cap = 4096 if small_vmem else 8192
    block_rows = _pick_block_rows(rows, cap, 1)
    grid = pl.cdiv(rows, block_rows)

    kernel = functools.partial(_focal_elem_kernel, alpha=float(alpha),
                               gamma=float(gamma), logits=bool(logits),
                               has_mask=has_mask)
    out = pl.pallas_call(
        kernel,
        # Output keeps the input dtype (halves writeback bytes for bf16 models).
        out_shape=jax.ShapeDtypeStruct((rows, _LANES), inputs.dtype),
        grid_spec=pltpu.PrefetchScalarGridSpec(
            num_scalar_prefetch=0,
            grid=(grid,),
            in_specs=[pl.BlockSpec((block_rows, _LANES), lambda i: (i, 0))
                      for _ in operands],
            out_specs=pl.BlockSpec((block_rows, _LANES), lambda i: (i, 0))),
        compiler_params=pltpu.CompilerParams(
            dimension_semantics=("parallel",),
            vmem_limit_bytes=(32 if small_vmem else 48) * 1024 * 1024),
    )(*operands)
    return out.reshape(-1)[:n].reshape(orig_shape)


# --------------------------------------------------------------------------- #
# FocalLoss.forward equivalent
# --------------------------------------------------------------------------- #
def focal_loss(inputs, targets, reduction, mask=None, *,
               alpha=1.0, gamma=2.0, logits=False):
    """Pallas port of FocalLoss.forward(inputs, targets, reduction, mask)."""
    if reduction is None:
        return _focal_no_reduction(inputs, targets, mask,
                                   alpha=alpha, gamma=gamma, logits=logits)
    need_msum = (reduction == 'mean') and (mask is not None)
    fsum, msum = _focal_partial_sums(
        [inputs], [targets], None if mask is None else [mask],
        alpha=alpha, gamma=gamma, logits=logits, need_msum=need_msum)
    if reduction == 'mean' and mask is None:
        return fsum[0] / inputs.size
    if reduction == 'mean':
        return fsum[0] / msum[0]
    return fsum[0]                                        # 'sum'


# --------------------------------------------------------------------------- #
# Pure-jnp reference (verification only)
# --------------------------------------------------------------------------- #
def _focal_loss_ref(inputs, targets, reduction, mask=None, *,
                    alpha=1.0, gamma=2.0, logits=False):
    x = inputs.astype(jnp.float32)
    t = targets.astype(jnp.float32)
    if logits:
        bce = jnp.maximum(x, 0.0) - x * t + jnp.log1p(jnp.exp(-jnp.abs(x)))
    else:
        bce = -(t * jnp.maximum(jnp.log(x), -100.0)
                + (1.0 - t) * jnp.maximum(jnp.log(1.0 - x), -100.0))
    pt = jnp.exp(-bce)
    fl = alpha * (1.0 - pt) ** gamma * bce
    if mask is not None:
        fl = fl * mask.astype(jnp.float32)
    if reduction == 'mean' and mask is None:
        return jnp.mean(fl)
    if reduction == 'mean':
        return jnp.sum(fl) / jnp.sum(mask)
    if reduction == 'sum':
        return jnp.sum(fl)
    return fl


# --------------------------------------------------------------------------- #
# ClassMPNLossFactory forward (focal heads fused into one Pallas call)
# --------------------------------------------------------------------------- #
# TODO(synk): the class CrossEntropy, refine SmoothL1, NaN guards and loss
# weighting are tiny scalar-side ops; they stay in plain jnp rather than Pallas.
def _ce_with_logits_mean(logits, target_idx, mask=None):
    logp = jax.nn.log_softmax(logits.astype(jnp.float32), axis=-1)
    ce = -jnp.take_along_axis(logp, target_idx[..., None].astype(jnp.int32),
                              axis=-1)[..., 0]
    if mask is not None:
        ce = ce * mask.astype(jnp.float32)
    return jnp.mean(ce)


def _smooth_l1_mean(pred, target):
    d = jnp.abs(pred.astype(jnp.float32) - target.astype(jnp.float32))
    return jnp.mean(jnp.where(d < 1.0, 0.5 * d * d, d - 0.5))


def class_mpn_loss_forward(outputs, labels, masks, *, loss_weights,
                           focal_alpha=1.0, focal_gamma=2.0, use_pallas=True):
    """Mirrors ClassMPNLossFactory.forward with USE_FOCAL/NODE_USE_FOCAL=True."""
    assert len(loss_weights) in (2, 3)
    preds_edges, edge_labels, edge_masks = outputs['edge'], labels['edge'], masks['edge']
    preds_nodes, node_labels, node_masks = outputs['node'], labels['node'], masks['node']
    preds_classes, class_labels = outputs['class'], labels['class']
    _ = masks.get('class', None)          # read but unused, as in the original

    # ---- refine / regression loss (plain jnp; tiny) -------------------------
    reg_loss = jnp.float32(0.0)
    if 'refine' in outputs and outputs['refine'] is not None:
        preds_pos, node_targets = outputs['refine'], labels['refine']
        node_person = preds_pos[:, 4].astype(jnp.int32)
        node_types = preds_pos[:, 2].astype(jnp.int32)
        targets = node_targets[node_person, node_types, :2]
        positions = preds_pos[:, :2].reshape(-1)
        reg = _smooth_l1_mean(positions, targets.reshape(-1))
        reg_loss = jnp.where(jnp.isnan(reg), 0.0, reg)

    # ---- node + edge focal losses: ONE fused Pallas call over all heads -----
    head_preds, head_labels, head_masks = [], [], []
    for p in preds_nodes:
        head_preds.append(p)
        head_labels.append(node_labels)   # shared object -> DMA'd once (dedup)
        head_masks.append(node_masks)
    n_node_heads = len(head_preds)
    for i, p in enumerate(preds_edges):
        if p is None:
            continue
        head_preds.append(p)
        head_labels.append(edge_labels[i])
        head_masks.append(edge_masks[i])

    if use_pallas:
        fsum, msum = _focal_partial_sums(
            head_preds, head_labels, head_masks, alpha=focal_alpha,
            gamma=focal_gamma, logits=True, need_msum=True)
        per_head = fsum / msum            # per-head 'mean' focal losses
    else:                                 # pure-jnp reference path
        per_head = jnp.stack([
            _focal_loss_ref(p, l, 'mean', m, alpha=focal_alpha,
                            gamma=focal_gamma, logits=True)
            for p, l, m in zip(head_preds, head_labels, head_masks)])

    node_loss = jnp.sum(per_head[:n_node_heads]) / len(preds_nodes)
    edge_loss = jnp.sum(per_head[n_node_heads:]) / len(preds_edges)
    edge_loss = jnp.where(jnp.isnan(edge_loss), 0.0, edge_loss)

    # ---- class loss (plain jnp; tiny) ---------------------------------------
    class_loss = jnp.float32(0.0)
    if preds_classes is not None:
        for p in preds_classes:
            class_loss = class_loss + _ce_with_logits_mean(p, class_labels,
                                                           node_labels)
        class_loss = class_loss / len(preds_classes)

    # Traced scalars (no float(): keeps the forward jittable, no host syncs).
    logging = {'edge': edge_loss, 'node': node_loss,
               'class_loss': class_loss, 'reg': reg_loss}
    if len(loss_weights) == 3:
        class_loss = class_loss * loss_weights[2]
    loss = (loss_weights[0] * node_loss + edge_loss * loss_weights[1]
            + reg_loss + class_loss)
    logging['loss'] = loss
    return loss, logging


# --------------------------------------------------------------------------- #
# Demo / correctness checks
# --------------------------------------------------------------------------- #
if __name__ == "__main__":
    key = jax.random.PRNGKey(0)
    keys = jax.random.split(key, 24)

    # ---- FocalLoss kernel unit checks (all reduction modes, both paths) ----
    shape = (2, 4, 16, 16)
    probs = jax.nn.sigmoid(jax.random.normal(keys[0], shape, jnp.float32))
    logit_in = jax.random.normal(keys[1], shape, jnp.float32)
    targets = jax.random.bernoulli(keys[2], 0.5, shape).astype(jnp.float32)
    mask = jax.random.bernoulli(keys[3], 0.7, shape).astype(jnp.float32)

    checks = []
    for logits_flag, x in ((False, probs), (True, logit_in)):
        out_mean = focal_loss(x, targets, 'mean', logits=logits_flag)
        ref_mean = _focal_loss_ref(x, targets, 'mean', logits=logits_flag)
        out_mmask = focal_loss(x, targets, 'mean', mask=mask, logits=logits_flag)
        ref_mmask = _focal_loss_ref(x, targets, 'mean', mask=mask, logits=logits_flag)
        out_sum = focal_loss(x, targets, 'sum', logits=logits_flag)
        ref_sum = _focal_loss_ref(x, targets, 'sum', logits=logits_flag)
        out_none = focal_loss(x, targets, None, logits=logits_flag)
        ref_none = _focal_loss_ref(x, targets, None, logits=logits_flag)
        jax.block_until_ready((out_mean, out_mmask, out_sum, out_none))
        checks += [
            jnp.allclose(out_mean, ref_mean, rtol=1e-5, atol=1e-5),
            jnp.allclose(out_mmask, ref_mmask, rtol=1e-5, atol=1e-5),
            jnp.allclose(out_sum, ref_sum, rtol=1e-4, atol=1e-4),
            jnp.allclose(out_none, ref_none, rtol=1e-5, atol=1e-5),
        ]
    # Ragged (non-1024-multiple) size exercises the masked tail branch.
    xr = jax.random.normal(keys[4], (3, 50), jnp.float32)
    tr = jax.random.bernoulli(keys[5], 0.5, (3, 50)).astype(jnp.float32)
    checks.append(jnp.allclose(focal_loss(xr, tr, 'mean', logits=True),
                               _focal_loss_ref(xr, tr, 'mean', logits=True),
                               rtol=1e-5, atol=1e-5))
    assert all(bool(c) for c in checks)

    # ---- ClassMPNLossFactory forward (fused focal heads via Pallas) --------
    N, C, E = 60, 17, 200
    node_labels = jax.random.bernoulli(keys[6], 0.4, (N,)).astype(jnp.float32)
    node_masks = jax.random.bernoulli(keys[7], 0.8, (N,)).astype(jnp.float32)
    preds_nodes = [jax.random.normal(keys[8], (N,), jnp.float32),
                   jax.random.normal(keys[9], (N,), jnp.float32)]
    edge_labels = [jax.random.bernoulli(keys[10], 0.3, (E,)).astype(jnp.float32),
                   jax.random.bernoulli(keys[11], 0.3, (E,)).astype(jnp.float32)]
    edge_masks = [jax.random.bernoulli(keys[12], 0.9, (E,)).astype(jnp.float32),
                  jax.random.bernoulli(keys[13], 0.9, (E,)).astype(jnp.float32)]
    preds_edges = [jax.random.normal(keys[14], (E,), jnp.float32), None]
    class_labels = jax.random.randint(keys[15], (N,), 0, C)
    preds_classes = [jax.random.normal(keys[16], (N, C), jnp.float32),
                     jax.random.normal(keys[17], (N, C), jnp.float32)]

    P, T, M = 3, C, 10
    node_targets = jax.random.normal(keys[18], (P, T, 2), jnp.float32)
    pos_xy = jax.random.normal(keys[19], (M, 2), jnp.float32)
    ptype = jax.random.randint(keys[20], (M,), 0, T).astype(jnp.float32)
    pperson = jax.random.randint(keys[21], (M,), 0, P).astype(jnp.float32)
    preds_pos = jnp.concatenate(          # columns: x, y, type, score, person
        [pos_xy, ptype[:, None], jnp.zeros((M, 1), jnp.float32), pperson[:, None]],
        axis=1)

    outputs = {'edge': preds_edges, 'node': preds_nodes, 'class': preds_classes,
               'refine': preds_pos}
    labels = {'edge': edge_labels, 'node': node_labels, 'class': class_labels,
              'refine': node_targets}
    masks_d = {'edge': edge_masks, 'node': node_masks, 'class': None}

    loss_weights = (1.0, 2.0, 0.5)
    loss, logging = class_mpn_loss_forward(outputs, labels, masks_d,
                                           loss_weights=loss_weights)
    loss_ref, _ = class_mpn_loss_forward(outputs, labels, masks_d,
                                         loss_weights=loss_weights,
                                         use_pallas=False)
    jax.block_until_ready(loss)
    assert bool(jnp.allclose(loss, loss_ref, rtol=1e-4, atol=1e-4))

    # The forward is jittable end-to-end now that logging keeps traced scalars.
    fwd_jit = jax.jit(functools.partial(class_mpn_loss_forward,
                                        loss_weights=loss_weights))
    loss_jit, _ = fwd_jit(outputs, labels, masks_d)
    jax.block_until_ready(loss_jit)
    assert bool(jnp.allclose(loss_jit, loss_ref, rtol=1e-4, atol=1e-4))

    print("KERNEL_OK")
</pallas_src>

<mosaic_0001>
module attributes {stable_mosaic.version = 11 : i64} {
  func.func @_focal_reduce_kernel(%arg0: i32, %arg1: i32, %arg2: memref<1xi32, #tpu.memory_space<smem>>, %arg3: memref<1xi32, #tpu.memory_space<smem>>, %arg4: memref<1x16x128xf32, #tpu.memory_space<vmem>>, %arg5: memref<1x16x128xf32, #tpu.memory_space<vmem>>, %arg6: memref<1x1x8x128xf32, #tpu.memory_space<vmem>>) attributes {dimension_semantics = [#tpu.dimension_semantics<parallel>, #tpu.dimension_semantics<parallel>], iteration_bounds = array<i64: 1, 1>, scalar_prefetch = 2 : i64, scratch_operands = 0 : i64, tpu.core_type = #tpu.core_type<tc>, window_params = [{transform_indices = @transform_0, window_bounds = array<i64: 1, 16, 128>}, {transform_indices = @transform_1, window_bounds = array<i64: 1, 16, 128>}, {transform_indices = @transform_2, window_bounds = array<i64: 1, 1, 8, 128>}]} {
    %0 = arith.index_cast %arg0 : i32 to index
    %1 = memref.load %arg2[%0] : memref<1xi32, #tpu.memory_space<smem>>
    %c2048_i32 = arith.constant 2048 : i32
    %2 = arith.muli %arg1, %c2048_i32 : i32
    %3 = arith.subi %1, %2 : i32
    %c2048_i32_0 = arith.constant 2048 : i32
    %4 = arith.cmpi sge, %3, %c2048_i32_0 : i32
    %5 = arith.extui %4 : i1 to i32
    %c0_i32 = arith.constant 0 : i32
    %6 = arith.cmpi ne, %5, %c0_i32 : i32
    scf.if %6 {
      %c0 = arith.constant 0 : index
      %c0_3 = arith.constant 0 : index
      %c0_4 = arith.constant 0 : index
      %10 = vector.load %arg4[%c0, %c0_3, %c0_4] : memref<1x16x128xf32, #tpu.memory_space<vmem>>, vector<1x16x128xf32>
      %11 = vector.shape_cast %10 : vector<1x16x128xf32> to vector<16x128xf32>
      %c0_5 = arith.constant 0 : index
      %c0_6 = arith.constant 0 : index
      %c0_7 = arith.constant 0 : index
      %12 = vector.load %arg5[%c0_5, %c0_6, %c0_7] : memref<1x16x128xf32, #tpu.memory_space<vmem>>, vector<1x16x128xf32>
      %13 = vector.shape_cast %12 : vector<1x16x128xf32> to vector<16x128xf32>
      %14 = math.log %11 : vector<16x128xf32>
      %cst = arith.constant -1.000000e+02 : f32
      %15 = vector.broadcast %cst : f32 to vector<16x128xf32>
      %16 = arith.maximumf %14, %15 : vector<16x128xf32>
      %cst_8 = arith.constant 1.000000e+00 : f32
      %17 = vector.broadcast %cst_8 : f32 to vector<16x128xf32>
      %18 = arith.subf %17, %11 : vector<16x128xf32>
      %19 = math.log %18 : vector<16x128xf32>
      %cst_9 = arith.constant -1.000000e+02 : f32
      %20 = vector.broadcast %cst_9 : f32 to vector<16x128xf32>
      %21 = arith.maximumf %19, %20 : vector<16x128xf32>
      %22 = arith.mulf %13, %16 : vector<16x128xf32>
      %cst_10 = arith.constant 1.000000e+00 : f32
      %23 = vector.broadcast %cst_10 : f32 to vector<16x128xf32>
      %24 = arith.subf %23, %13 : vector<16x128xf32>
      %25 = arith.mulf %24, %21 : vector<16x128xf32>
      %26 = arith.addf %22, %25 : vector<16x128xf32>
      %cst_11 = arith.constant 0.000000e+00 : f32
      %27 = vector.broadcast %cst_11 : f32 to vector<16x128xf32>
      %28 = arith.subf %27, %26 : vector<16x128xf32>
      %cst_12 = arith.constant 0.000000e+00 : f32
      %29 = vector.broadcast %cst_12 : f32 to vector<16x128xf32>
      %30 = arith.subf %29, %28 : vector<16x128xf32>
      %31 = math.exp %30 : vector<16x128xf32>
      %cst_13 = arith.constant 1.000000e+00 : f32
      %32 = vector.broadcast %cst_13 : f32 to vector<16x128xf32>
      %33 = arith.subf %32, %31 : vector<16x128xf32>
      %cst_14 = arith.constant 0.000000e+00 : f32
      %34 = vector.broadcast %cst_14 : f32 to vector<16x128xf32>
      %35 = arith.maximumf %33, %34 : vector<16x128xf32>
      %36 = arith.mulf %35, %35 : vector<16x128xf32>
      %cst_15 = arith.constant 1.000000e+00 : f32
      %37 = vector.broadcast %cst_15 : f32 to vector<16x128xf32>
      %38 = arith.mulf %37, %36 : vector<16x128xf32>
      %39 = arith.mulf %38, %28 : vector<16x128xf32>
      %40 = vector.shape_cast %39 : vector<16x128xf32> to vector<2x8x128xf32>
      %cst_16 = arith.constant dense<0.000000e+00> : vector<8x128xf32>
      %41 = vector.multi_reduction <add>, %40, %cst_16 [0] : vector<2x8x128xf32> to vector<8x128xf32>
      %42 = vector.shape_cast %41 : vector<8x128xf32> to vector<1x1x8x128xf32>
      %c0_17 = arith.constant 0 : index
      %c0_18 = arith.constant 0 : index
      %c0_19 = arith.constant 0 : index
      %c0_20 = arith.constant 0 : index
      %43 = vector.load %arg6[%c0_17, %c0_18, %c0_19, %c0_20] : memref<1x1x8x128xf32, #tpu.memory_space<vmem>>, vector<1x1x8x128xf32>
      tpu.vector_store %arg6[%c0_17, %c0_18, %c0_19, %c0_20], %42 {strides = array<i32>} : memref<1x1x8x128xf32, #tpu.memory_space<vmem>>, vector<1x1x8x128xf32>,
    } else {
    }
    %c2048_i32_1 = arith.constant 2048 : i32
    %7 = arith.cmpi slt, %3, %c2048_i32_1 : i32
    %8 = arith.extui %7 : i1 to i32
    %c0_i32_2 = arith.constant 0 : i32
    %9 = arith.cmpi ne, %8, %c0_i32_2 : i32
    scf.if %9 {
      %c0 = arith.constant 0 : index
      %c0_3 = arith.constant 0 : index
      %c0_4 = arith.constant 0 : index
      %10 = vector.load %arg4[%c0, %c0_3, %c0_4] : memref<1x16x128xf32, #tpu.memory_space<vmem>>, vector<1x16x128xf32>
      %11 = vector.shape_cast %10 : vector<1x16x128xf32> to vector<16x128xf32>
      %c0_5 = arith.constant 0 : index
      %c0_6 = arith.constant 0 : index
      %c0_7 = arith.constant 0 : index
      %12 = vector.load %arg5[%c0_5, %c0_6, %c0_7] : memref<1x16x128xf32, #tpu.memory_space<vmem>>, vector<1x16x128xf32>
      %13 = vector.shape_cast %12 : vector<1x16x128xf32> to vector<16x128xf32>
      %14 = math.log %11 : vector<16x128xf32>
      %cst = arith.constant -1.000000e+02 : f32
      %15 = vector.broadcast %cst : f32 to vector<16x128xf32>
      %16 = arith.maximumf %14, %15 : vector<16x128xf32>
      %cst_8 = arith.constant 1.000000e+00 : f32
      %17 = vector.broadcast %cst_8 : f32 to vector<16x128xf32>
      %18 = arith.subf %17, %11 : vector<16x128xf32>
      %19 = math.log %18 : vector<16x128xf32>
      %cst_9 = arith.constant -1.000000e+02 : f32
      %20 = vector.broadcast %cst_9 : f32 to vector<16x128xf32>
      %21 = arith.maximumf %19, %20 : vector<16x128xf32>
      %22 = arith.mulf %13, %16 : vector<16x128xf32>
      %cst_10 = arith.constant 1.000000e+00 : f32
      %23 = vector.broadcast %cst_10 : f32 to vector<16x128xf32>
      %24 = arith.subf %23, %13 : vector<16x128xf32>
      %25 = arith.mulf %24, %21 : vector<16x128xf32>
      %26 = arith.addf %22, %25 : vector<16x128xf32>
      %cst_11 = arith.constant 0.000000e+00 : f32
      %27 = vector.broadcast %cst_11 : f32 to vector<16x128xf32>
      %28 = arith.subf %27, %26 : vector<16x128xf32>
      %cst_12 = arith.constant 0.000000e+00 : f32
      %29 = vector.broadcast %cst_12 : f32 to vector<16x128xf32>
      %30 = arith.subf %29, %28 : vector<16x128xf32>
      %31 = math.exp %30 : vector<16x128xf32>
      %cst_13 = arith.constant 1.000000e+00 : f32
      %32 = vector.broadcast %cst_13 : f32 to vector<16x128xf32>
      %33 = arith.subf %32, %31 : vector<16x128xf32>
      %cst_14 = arith.constant 0.000000e+00 : f32
      %34 = vector.broadcast %cst_14 : f32 to vector<16x128xf32>
      %35 = arith.maximumf %33, %34 : vector<16x128xf32>
      %36 = arith.mulf %35, %35 : vector<16x128xf32>
      %cst_15 = arith.constant 1.000000e+00 : f32
      %37 = vector.broadcast %cst_15 : f32 to vector<16x128xf32>
      %38 = arith.mulf %37, %36 : vector<16x128xf32>
      %39 = arith.mulf %38, %28 : vector<16x128xf32>
      %40 = tpu.iota {dimensions = array<i32: 0>} : vector<16x128xi32>
      %41 = tpu.iota {dimensions = array<i32: 1>} : vector<16x128xi32>
      %c128_i32 = arith.constant 128 : i32
      %42 = vector.broadcast %c128_i32 : i32 to vector<16x128xi32>
      %43 = arith.muli %40, %42 : vector<16x128xi32>
      %44 = arith.addi %43, %41 : vector<16x128xi32>
      %45 = vector.broadcast %3 : i32 to vector<16x128xi32>
      %46 = arith.cmpi slt, %44, %45 : vector<16x128xi32>
      %cst_16 = arith.constant 0.000000e+00 : f32
      %47 = vector.broadcast %cst_16 : f32 to vector<16x128xf32>
      %48 = arith.select %46, %39, %47 : vector<16x128xi1>, vector<16x128xf32>
      %49 = vector.shape_cast %48 : vector<16x128xf32> to vector<2x8x128xf32>
      %cst_17 = arith.constant dense<0.000000e+00> : vector<8x128xf32>
      %50 = vector.multi_reduction <add>, %49, %cst_17 [0] : vector<2x8x128xf32> to vector<8x128xf32>
      %51 = vector.shape_cast %50 : vector<8x128xf32> to vector<1x1x8x128xf32>
      %c0_18 = arith.constant 0 : index
      %c0_19 = arith.constant 0 : index
      %c0_20 = arith.constant 0 : index
      %c0_21 = arith.constant 0 : index
      %52 = vector.load %arg6[%c0_18, %c0_19, %c0_20, %c0_21] : memref<1x1x8x128xf32, #tpu.memory_space<vmem>>, vector<1x1x8x128xf32>
      tpu.vector_store %arg6[%c0_18, %c0_19, %c0_20, %c0_21], %51 {strides = array<i32>} : memref<1x1x8x128xf32, #tpu.memory_space<vmem>>, vector<1x1x8x128xf32>,
    } else {
    }
    return
  }
  func.func @transform_0(%arg0: i32, %arg1: i32, %arg2: memref<1xi32, #tpu.memory_space<smem>>, %arg3: memref<1xi32, #tpu.memory_space<smem>>) -> (i32, i32, i32) {
    %c0_i32 = arith.constant 0 : i32
    %c0_i32_0 = arith.constant 0 : i32
    return %arg0, %arg1, %c0_i32 : i32, i32, i32
  }
  func.func @transform_1(%arg0: i32, %arg1: i32, %arg2: memref<1xi32, #tpu.memory_space<smem>>, %arg3: memref<1xi32, #tpu.memory_space<smem>>) -> (i32, i32, i32) {
    %0 = arith.index_cast %arg0 : i32 to index
    %1 = memref.load %arg3[%0] : memref<1xi32, #tpu.memory_space<smem>>
    %c0_i32 = arith.constant 0 : i32
    %c0_i32_0 = arith.constant 0 : i32
    return %1, %arg1, %c0_i32 : i32, i32, i32
  }
  func.func @transform_2(%arg0: i32, %arg1: i32, %arg2: memref<1xi32, #tpu.memory_space<smem>>, %arg3: memref<1xi32, #tpu.memory_space<smem>>) -> (i32, i32, i32, i32) {
    %c0_i32 = arith.constant 0 : i32
    %c0_i32_0 = arith.constant 0 : i32
    %c0_i32_1 = arith.constant 0 : i32
    return %arg0, %arg1, %c0_i32, %c0_i32_0 : i32, i32, i32, i32
  }
}

</mosaic_0001>

<llo_original>
// kernel: tpu_custom_call.1
$region0: #{tpu_custom_call.1}
  #allocation0 [shape = 'u32[]', space=smem, size = 0x4, offset = 0x4, fixed_abs, tag = 'smem constant byte address 0x4 - core index']
  #allocation1 [shape = 'u32[72,128]{1,0:T(1,128)}', space=vmem, size = 0x9000, scoped, tag = 'internal scratch']
  #allocation2 [shape = 's32[1]{0}', space=sflag, size = 0x4, scoped, tag = 'scoped memory for tpu_custom_call.1']
  #allocation3 [shape = 's32[1]{0:T(128)S(6)}', space=smem, size = 0x200, scoped, tag = 'prefetched SMEM operand 0']
  #allocation4 [shape = 's32[1]{0:T(128)S(6)}', space=smem, size = 0x200, scoped, tag = 'prefetched SMEM operand 1']
  %s0 = inlined_call_operand.<no memory space> [shape: s32[1], index: 0, kind: input, shape index: {}]
  %s1 = inlined_call_operand.<no memory space> [shape: s32[1], index: 1, kind: input, shape index: {}]
  %s2 = inlined_call_operand.hbm [shape: f32[1,16,128], index: 2, kind: input, shape index: {}]
  %s3 = inlined_call_operand.hbm [shape: f32[1,16,128], index: 3, kind: input, shape index: {}]
  %s4 = inlined_call_operand.hbm [shape: f32[1,1,8,128], index: 4, kind: output, shape index: {}]
  %s5 = sld [smem:[#allocation0]]
  $region34: #{tpu_custom_call.1} parent=0
    _
  %s7 = ssub.s32 1, %s5
  %s8 = scalar_select 0, %s7, %s5
  %9 = sst [smem:[#allocation3]] %s0
  %10 = sst [smem:[#allocation4]] %s1
  $region1: #{tpu_custom_call.1} parent=0
    #allocation5 [shape = 'u8[8192]{0}', space=vmem, size = 0x2000, scoped, tag = 'input window, operand 2, single buffered']
    #allocation6 [shape = 's32[1]{0}', space=sflag, size = 0x4, scoped, tag = 'scoped memory for tpu_custom_call.1']
    #allocation7 [shape = 's32[1]{0}', space=sflag, size = 0x4, scoped, tag = 'scoped memory for tpu_custom_call.1']
    #allocation8 [shape = 'u8[8192]{0}', space=vmem, size = 0x2000, scoped, tag = 'input window, operand 3, single buffered']
    #allocation9 [shape = 's32[1]{0}', space=sflag, size = 0x4, scoped, tag = 'scoped memory for tpu_custom_call.1']
    #allocation10 [shape = 'u8[4096]{0}', space=vmem, size = 0x1000, scoped, tag = 'output window, operand 0, single buffered']
    %11 = vsyncpa [#allocation6], 0
    %12 = vsyncpa [#allocation9], 0
    %13 = vsyncpa [#allocation7], 0
    // Predicated region
    $region2: #{tpu_custom_call.1} parent=1 // pred_check
      _
    $region3: #{tpu_custom_call.1} parent=1 // pred_check_branch
      %15 = sbr.rel (0) target = $region5
    $region4: #{tpu_custom_call.1} parent=1 // pred_region
      %17 = vsyncadd [#allocation6], 0
      %s18 = sshll.u32 %s2, 4
      %s19 = int_to_ptr.hbm [resolvable:$true] %s18
      %s20 = sshll.u32 [#allocation5], 4
      %s21 = int_to_ptr.vmem [resolvable:$true] %s20
      %26 = dma.hbm_to_vmem [thread:$0]  %s19, 256, %s21, [#allocation6], 128, 128, 8
    $region5: #{tpu_custom_call.1} parent=1 // pred_fallthru
      _
    // Predicated region
    $region6: #{tpu_custom_call.1} parent=1 // pred_check
      _
    $region7: #{tpu_custom_call.1} parent=1 // pred_check_branch
      %28 = sbr.rel (0) target = $region9
    $region8: #{tpu_custom_call.1} parent=1 // pred_region
      %s29 = sld [smem:[#allocation4]]
      %31 = vsyncadd [#allocation9], 0
      %s32 = smul.addr %s29, 2
      %s33 = smul.addr %s32, 8
      %s34 = scalar_lea.hbm %s3, %s33
      %s35 = sshll.u32 %s34, 4
      %s36 = int_to_ptr.hbm [resolvable:$true] %s35
      %s37 = sshll.u32 [#allocation8], 4
      %s38 = int_to_ptr.vmem [resolvable:$true] %s37
      %43 = dma.hbm_to_vmem [thread:$0]  %s36, 256, %s38, [#allocation9], 128, 128, 8
    $region9: #{tpu_custom_call.1} parent=1 // pred_fallthru
      _
    // Predicated region
    $region10: #{tpu_custom_call.1} parent=1 // pred_check
      _
    $region11: #{tpu_custom_call.1} parent=1 // pred_check_branch
      %45 = sbr.rel (0) target = $region13
    $region12: #{tpu_custom_call.1} parent=1 // pred_region
      %47 = dma.done [#allocation6], 256
    $region13: #{tpu_custom_call.1} parent=1 // pred_fallthru
      _
    // Predicated region
    $region14: #{tpu_custom_call.1} parent=1 // pred_check
      _
    $region15: #{tpu_custom_call.1} parent=1 // pred_check_branch
      %49 = sbr.rel (0) target = $region17
    $region16: #{tpu_custom_call.1} parent=1 // pred_region
      %51 = dma.done [#allocation9], 256
    $region17: #{tpu_custom_call.1} parent=1 // pred_fallthru
      _
    %s52 = sld [smem:[#allocation4]]
    %s53 = sld [smem:[#allocation3]]
    %s54 = smul.u32 0, 2048
    %s55 = ssub.s32 %s53, %s54
    %p56 = scmp.ge.s32.totalorder %s55, 2048
    // Predicated region
    $region18: #{tpu_custom_call.1} parent=1 // pred_check
      %p57 = pneg %p56
    $region19: #{tpu_custom_call.1} parent=1 // pred_check_branch
      %59 = sbr.rel (%p57) target = $region21
    $region20: #{tpu_custom_call.1} parent=1 // pred_region
      %v60 = vld [vmem:[#allocation5] sm:$0xff]
      %v61 = vld [vmem:[#allocation5 + $0x8] sm:$0xff]
      %v62 = vld [vmem:[#allocation8] sm:$0xff]
      %v63 = vld [vmem:[#allocation8 + $0x8] sm:$0xff]
      %v64 = vlog2.pop %v60
      %v65 = vmul.f32 %v64, 0.6931472
      %v66 = vlog2.pop %v61
      %v67 = vmul.f32 %v66, 0.6931472
      %v68 = vmax.f32 %v65, -100.0
      %v69 = vmax.f32 %v67, -100.0
      %v70 = vsub.f32 1.0, %v60
      %v71 = vsub.f32 1.0, %v61
      %v72 = vlog2.pop %v70
      %v73 = vmul.f32 %v72, 0.6931472
      %v74 = vlog2.pop %v71
      %v75 = vmul.f32 %v74, 0.6931472
      %v76 = vmax.f32 %v73, -100.0
      %v77 = vmax.f32 %v75, -100.0
      %v78 = vmul.f32 %v62, %v68
      %v79 = vmul.f32 %v63, %v69
      %v80 = vsub.f32 1.0, %v62
      %v81 = vsub.f32 1.0, %v63
      %v82 = vmul.f32 %v80, %v76
      %v83 = vmul.f32 %v81, %v77
      %v84 = vadd.f32 %v78, %v82
      %v85 = vadd.f32 %v79, %v83
      %v86 = vsub.f32 0.0, %v84
      %v87 = vsub.f32 0.0, %v85
      %v88 = vsub.f32 0.0, %v86
      %v89 = vsub.f32 0.0, %v87
      %v90 = vmul.f32 %v88, 1.442695
      %v91 = vpow.pop %v90
      %v92 = vmul.f32 %v89, 1.442695
      %v93 = vpow.pop %v92
      %v94 = vsub.f32 1.0, %v91
      %v95 = vsub.f32 1.0, %v93
      %v96 = vmax.f32 %v94, 0.0
      %v97 = vmax.f32 %v95, 0.0
      %v98 = vmul.f32 %v96, %v96
      %v99 = vmul.f32 %v97, %v97
      %v100 = vmul.f32 %v98, %v86
      %v101 = vmul.f32 %v99, %v87
      %v102 = vadd.f32 %v100, %v101
      %103 = vst [vmem:[#allocation10] sm:$0xff] %v102
    $region21: #{tpu_custom_call.1} parent=1 // pred_fallthru
      _
    %p104 = scmp.lt.s32.totalorder %s55, 2048
    // Predicated region
    $region22: #{tpu_custom_call.1} parent=1 // pred_check
      %p105 = pneg %p104
    $region23: #{tpu_custom_call.1} parent=1 // pred_check_branch
      %107 = sbr.rel (%p105) target = $region25
    $region24: #{tpu_custom_call.1} parent=1 // pred_region
      %v108 = vld [vmem:[#allocation5] sm:$0xff]
      %v109 = vld [vmem:[#allocation5 + $0x8] sm:$0xff]
      %v110 = vld [vmem:[#allocation8] sm:$0xff]
      %v111 = vld [vmem:[#allocation8 + $0x8] sm:$0xff]
      %v112 = vlog2.pop %v108
      %v113 = vmul.f32 %v112, 0.6931472
      %v114 = vlog2.pop %v109
      %v115 = vmul.f32 %v114, 0.6931472
      %v116 = vmax.f32 %v113, -100.0
      %v117 = vmax.f32 %v115, -100.0
      %v118 = vsub.f32 1.0, %v108
      %v119 = vsub.f32 1.0, %v109
      %v120 = vlog2.pop %v118
      %v121 = vmul.f32 %v120, 0.6931472
      %v122 = vlog2.pop %v119
      %v123 = vmul.f32 %v122, 0.6931472
      %v124 = vmax.f32 %v121, -100.0
      %v125 = vmax.f32 %v123, -100.0
      %v126 = vmul.f32 %v110, %v116
      %v127 = vmul.f32 %v111, %v117
      %v128 = vsub.f32 1.0, %v110
      %v129 = vsub.f32 1.0, %v111
      %v130 = vmul.f32 %v128, %v124
      %v131 = vmul.f32 %v129, %v125
      %v132 = vadd.f32 %v126, %v130
      %v133 = vadd.f32 %v127, %v131
      %v134 = vsub.f32 0.0, %v132
      %v135 = vsub.f32 0.0, %v133
      %v136 = vsub.f32 0.0, %v134
      %v137 = vsub.f32 0.0, %v135
      %v138 = vmul.f32 %v136, 1.442695
      %v139 = vpow.pop %v138
      %v140 = vmul.f32 %v137, 1.442695
      %v141 = vpow.pop %v140
      %v142 = vsub.f32 1.0, %v139
      %v143 = vsub.f32 1.0, %v141
      %v144 = vmax.f32 %v142, 0.0
      %v145 = vmax.f32 %v143, 0.0
      %v146 = vmul.f32 %v144, %v144
      %v147 = vmul.f32 %v145, %v145
      %v148 = vmul.f32 %v146, %v134
      %v149 = vmul.f32 %v147, %v135
      %v150 = vlaneseq
      %v151 = vshrl.u32 %v150, 7
      %v152 = vadd.s32 %v151, 8
      %v153 = vlaneseq
      %v154 = vand.u32 %v153, 127
      %v155 = vmul.u32 %v151, 128
      %v156 = vmul.u32 %v152, 128
      %v157 = vadd.s32 %v155, %v154
      %v158 = vadd.s32 %v156, %v154
      %v159 = vstv %s55
      %vm160 = vcmp.lt.s32.totalorder %v157, %v159
      %vm161 = vcmp.lt.s32.totalorder %v158, %v159
      %v162 = vsel %vm160, %v148, 0.0
      %v163 = vsel %vm161, %v149, 0.0
      %v164 = vadd.f32 %v162, %v163
      %165 = vst [vmem:[#allocation10] sm:$0xff] %v164
    $region25: #{tpu_custom_call.1} parent=1 // pred_fallthru
      _
    // Predicated region
    $region26: #{tpu_custom_call.1} parent=1 // pred_check
      _
    $region27: #{tpu_custom_call.1} parent=1 // pred_check_branch
      %167 = sbr.rel (0) target = $region29
    $region28: #{tpu_custom_call.1} parent=1 // pred_region
      %169 = vsyncadd [#allocation7], 0
      %s171 = sshll.u32 [#allocation10], 4
      %s172 = int_to_ptr.vmem [resolvable:$true] %s171
      %s173 = sshll.u32 %s4, 4
      %s174 = int_to_ptr.hbm [resolvable:$true] %s173
      %176 = dma.vmem_to_hbm [thread:$0]  %s172, 128, %s174, [#allocation7]
    $region29: #{tpu_custom_call.1} parent=1 // pred_fallthru
      _
    // Predicated region
    $region30: #{tpu_custom_call.1} parent=1 // pred_check
      _
    $region31: #{tpu_custom_call.1} parent=1 // pred_check_branch
      %178 = sbr.rel (0) target = $region33
    $region32: #{tpu_custom_call.1} parent=1 // pred_region
      %180 = dma.done [#allocation7], 128
    $region33: #{tpu_custom_call.1} parent=1 // pred_fallthru
      _
    %181 = vsyncpa [#allocation6], 1
    %182 = vsyncpa [#allocation9], 1
    %183 = vsyncpa [#allocation7], 1

</llo_original>
